<compile_context>
chip_gen: v6e
topology: v6e:2x2x1
jax: 0.10.0
libtpu: 0.0.40
codegen_flags: <defaults>
</compile_context>

<pallas_src>
import jax
import jax.numpy as jnp
from jax.experimental import pallas as pl
from jax.experimental.pallas import tpu as pltpu


def _identity_dma_kernel(x_hbm, o_hbm, sem):
    # One HBM->HBM DMA covering the whole array.  The TensorCore only issues
    # the descriptor and waits; the DMA engines stream the bytes at HBM
    # bandwidth.  No VMEM, no vregs, no tiling constraints.
    cp = pltpu.make_async_copy(x_hbm, o_hbm, sem)
    cp.start()
    cp.wait()


def spatial_cross_scale_integrator_pallas(x):
    """Identity forward of SpatialCrossScaleIntegrator as a single HBM->HBM DMA."""
    if x.size == 0:
        return x

    bytes_per_elem = jnp.dtype(x.dtype).itemsize
    cost = pl.CostEstimate(
        flops=0,
        transcendentals=0,
        bytes_accessed=2 * x.size * bytes_per_elem,
    )

    return pl.pallas_call(
        _identity_dma_kernel,
        out_shape=jax.ShapeDtypeStruct(x.shape, x.dtype),
        in_specs=[pl.BlockSpec(memory_space=pl.ANY)],
        out_specs=pl.BlockSpec(memory_space=pl.ANY),
        scratch_shapes=[pltpu.SemaphoreType.DMA],
        cost_estimate=cost,
    )(x)


class SpatialCrossScaleIntegratorPallas:
    """Mirror of the PyTorch module's constructor signature + forward."""

    def __init__(self, fusion_list, h_w=((160, 80), (80, 40), (40, 20))):
        self.fusion_list = fusion_list
        self.h_w = list(h_w)

    def __call__(self, x):
        # Matches the PyTorch forward exactly: split_sizes is computed but
        # never used, and x is returned unchanged (here: via the DMA kernel).
        split_sizes = [h * w for h, w in self.h_w]  # noqa: F841 (kept for parity)
        del split_sizes
        return spatial_cross_scale_integrator_pallas(x)


if __name__ == "__main__":
    key = jax.random.PRNGKey(0)

    # Small shapes consistent with the module: x is a multi-scale token
    # sequence (B, sum(h*w), C).  Scaled-down h_w keeps the demo small.
    h_w_small = [(16, 8), (8, 4), (4, 2)]        # split sizes [128, 32, 8]
    B, C = 2, 32
    N = sum(h * w for h, w in h_w_small)         # 168 tokens

    x = jax.random.normal(key, (B, N, C), jnp.float32)

    module = SpatialCrossScaleIntegratorPallas(fusion_list=[0, 1, 2],
                                               h_w=h_w_small)
    y = jax.block_until_ready(module(x))

    assert y.shape == x.shape and y.dtype == x.dtype
    assert jnp.array_equal(y, x), "identity forward mismatch"

    # Also exercise a non-f32 dtype and an odd shape to confirm there are no
    # tiling / packing constraints in the ANY-space DMA path.
    xb = jax.random.normal(jax.random.PRNGKey(1), (3, 41, 17), jnp.bfloat16)
    yb = jax.block_until_ready(module(xb))
    assert yb.shape == xb.shape and yb.dtype == xb.dtype
    assert jnp.array_equal(yb, xb), "identity forward mismatch (bf16)"

    print("KERNEL_OK")
</pallas_src>

<mosaic_0001>
module attributes {stable_mosaic.version = 11 : i64} {
  func.func @_identity_dma_kernel(%arg0: memref<2x168x32xf32, #tpu.memory_space<any>>, %arg1: memref<2x168x32xf32, #tpu.memory_space<any>>, %arg2: memref<!tpu.dma_semaphore, #tpu.memory_space<semaphore_mem>>) attributes {dimension_semantics = [], scalar_prefetch = 0 : i64, scratch_operands = 1 : i64, tpu.core_type = #tpu.core_type<tc>} {
    tpu.enqueue_dma source(%arg0 : memref<2x168x32xf32, #tpu.memory_space<any>>) target(%arg1 : memref<2x168x32xf32, #tpu.memory_space<any>>) target_semaphore(%arg2 : memref<!tpu.dma_semaphore, #tpu.memory_space<semaphore_mem>>)
    tpu.wait_dma2 semaphore(%arg2 : memref<!tpu.dma_semaphore, #tpu.memory_space<semaphore_mem>>) src(%arg0 : memref<2x168x32xf32, #tpu.memory_space<any>>) dst(%arg1 : memref<2x168x32xf32, #tpu.memory_space<any>>)
    return
  }
}

</mosaic_0001>

<llo_original>
// kernel: tpu_custom_call.1
$region0: #{tpu_custom_call.1}
  #allocation0 [shape = 'u32[]', space=smem, size = 0x4, offset = 0x4, fixed_abs, tag = 'smem constant byte address 0x4 - core index']
  #allocation1 [shape = 'u32[144,128]{1,0:T(1,128)}', space=vmem, size = 0x12000, scoped, tag = 'internal scratch']
  #allocation2 [shape = 's32[1]{0}', space=sflag, size = 0x4, scoped, tag = 'scratch operand']
  #allocation3 [shape = 's32[]', space=sflag, size = 0x4, offset = 0, fixed_abs, tag = 'sflag constant byte address 0x0 - dummy sync flag']
  %s0 = inlined_call_operand.vmem [shape: f32[2,168,32], index: 0, kind: input, shape index: {}]
  %s1 = inlined_call_operand.vmem [shape: f32[2,168,32], index: 1, kind: output, shape index: {}]
  %s2 = sld [smem:[#allocation0]]
  $region36: #{tpu_custom_call.1} parent=0
    _
  %s4 = ssub.s32 1, %s2
  %s5 = scalar_select 0, %s4, %s2
  %p7 = scmp.lt.u32.totalorder 336, 8
  %p8 = pneg %p7
  // Predicated region
  $region2: #{tpu_custom_call.1} parent=0 // pred_check
    _
  $region3: #{tpu_custom_call.1} parent=0 // pred_check_branch
    %10 = sbr.rel (%p7) target = $region5
  $region4: #{tpu_custom_call.1} parent=0 // pred_region
    %s26 = sand.u32 336, 7
    %p27 = scmp.eq.s32.totalorder %s26, 0
    // Predicated region
    $region17: #{tpu_custom_call.1} parent=4 // pred_check
      %p28 = pneg %p27
    $region18: #{tpu_custom_call.1} parent=4 // pred_check_branch
      %30 = sbr.rel (%p28) target = $region20
    $region19: #{tpu_custom_call.1} parent=4 // pred_region
      loop: start=0, step=1, limit=1
      $region21: #{tpu_custom_call.1} parent=19 // loop_pre_header
        _
      $region22: #{tpu_custom_call.1} parent=19 // loop_header
        %s32 = sphi 0, %s36
        %p33 = scmp.ge.s32.totalorder %s32, 1
        %s37 = sphi %s0, %s0
        %s38 = sphi %s1, %s1
      $region23: #{tpu_custom_call.1} parent=19 // loop_header_branch
        %35 = sbr.rel (%p33) target = $region27
      $region24: #{tpu_custom_call.1} parent=19 // loop_body
        %v39 = vld [vmem:[%s37] sm:$0xff]
        %40 = vst [vmem:[%s38] sm:$0xff] %v39
        %v41 = vld [vmem:[%s37 + $0x8] sm:$0xff]
        %42 = vst [vmem:[%s38 + $0x8] sm:$0xff] %v41
        %v43 = vld [vmem:[%s37 + $0x10] sm:$0xff]
        %44 = vst [vmem:[%s38 + $0x10] sm:$0xff] %v43
        %v45 = vld [vmem:[%s37 + $0x18] sm:$0xff]
        %46 = vst [vmem:[%s38 + $0x18] sm:$0xff] %v45
        %v47 = vld [vmem:[%s37 + $0x20] sm:$0xff]
        %48 = vst [vmem:[%s38 + $0x20] sm:$0xff] %v47
        %v49 = vld [vmem:[%s37 + $0x28] sm:$0xff]
        %50 = vst [vmem:[%s38 + $0x28] sm:$0xff] %v49
        %v51 = vld [vmem:[%s37 + $0x30] sm:$0xff]
        %52 = vst [vmem:[%s38 + $0x30] sm:$0xff] %v51
        %v53 = vld [vmem:[%s37 + $0x38] sm:$0xff]
        %54 = vst [vmem:[%s38 + $0x38] sm:$0xff] %v53
        %v55 = vld [vmem:[%s37 + $0x40] sm:$0xff]
        %56 = vst [vmem:[%s38 + $0x40] sm:$0xff] %v55
        %v57 = vld [vmem:[%s37 + $0x48] sm:$0xff]
        %58 = vst [vmem:[%s38 + $0x48] sm:$0xff] %v57
        %v59 = vld [vmem:[%s37 + $0x50] sm:$0xff]
        %60 = vst [vmem:[%s38 + $0x50] sm:$0xff] %v59
        %v61 = vld [vmem:[%s37 + $0x58] sm:$0xff]
        %62 = vst [vmem:[%s38 + $0x58] sm:$0xff] %v61
        %v63 = vld [vmem:[%s37 + $0x60] sm:$0xff]
        %64 = vst [vmem:[%s38 + $0x60] sm:$0xff] %v63
        %v65 = vld [vmem:[%s37 + $0x68] sm:$0xff]
        %66 = vst [vmem:[%s38 + $0x68] sm:$0xff] %v65
        %v67 = vld [vmem:[%s37 + $0x70] sm:$0xff]
        %68 = vst [vmem:[%s38 + $0x70] sm:$0xff] %v67
        %v69 = vld [vmem:[%s37 + $0x78] sm:$0xff]
        %70 = vst [vmem:[%s38 + $0x78] sm:$0xff] %v69
        %v71 = vld [vmem:[%s37 + $0x80] sm:$0xff]
        %72 = vst [vmem:[%s38 + $0x80] sm:$0xff] %v71
        %v73 = vld [vmem:[%s37 + $0x88] sm:$0xff]
        %74 = vst [vmem:[%s38 + $0x88] sm:$0xff] %v73
        %v75 = vld [vmem:[%s37 + $0x90] sm:$0xff]
        %76 = vst [vmem:[%s38 + $0x90] sm:$0xff] %v75
        %v77 = vld [vmem:[%s37 + $0x98] sm:$0xff]
        %78 = vst [vmem:[%s38 + $0x98] sm:$0xff] %v77
        %v79 = vld [vmem:[%s37 + $0xa0] sm:$0xff]
        %80 = vst [vmem:[%s38 + $0xa0] sm:$0xff] %v79
        %v81 = vld [vmem:[%s37 + $0xa8] sm:$0xff]
        %82 = vst [vmem:[%s38 + $0xa8] sm:$0xff] %v81
        %v83 = vld [vmem:[%s37 + $0xb0] sm:$0xff]
        %84 = vst [vmem:[%s38 + $0xb0] sm:$0xff] %v83
        %v85 = vld [vmem:[%s37 + $0xb8] sm:$0xff]
        %86 = vst [vmem:[%s38 + $0xb8] sm:$0xff] %v85
        %v87 = vld [vmem:[%s37 + $0xc0] sm:$0xff]
        %88 = vst [vmem:[%s38 + $0xc0] sm:$0xff] %v87
        %v89 = vld [vmem:[%s37 + $0xc8] sm:$0xff]
        %90 = vst [vmem:[%s38 + $0xc8] sm:$0xff] %v89
        %v91 = vld [vmem:[%s37 + $0xd0] sm:$0xff]
        %92 = vst [vmem:[%s38 + $0xd0] sm:$0xff] %v91
        %v93 = vld [vmem:[%s37 + $0xd8] sm:$0xff]
        %94 = vst [vmem:[%s38 + $0xd8] sm:$0xff] %v93
        %v95 = vld [vmem:[%s37 + $0xe0] sm:$0xff]
        %96 = vst [vmem:[%s38 + $0xe0] sm:$0xff] %v95
        %v97 = vld [vmem:[%s37 + $0xe8] sm:$0xff]
        %98 = vst [vmem:[%s38 + $0xe8] sm:$0xff] %v97
        %v99 = vld [vmem:[%s37 + $0xf0] sm:$0xff]
        %100 = vst [vmem:[%s38 + $0xf0] sm:$0xff] %v99
        %v101 = vld [vmem:[%s37 + $0xf8] sm:$0xff]
        %102 = vst [vmem:[%s38 + $0xf8] sm:$0xff] %v101
        %v103 = vld [vmem:[%s37 + $0x100] sm:$0xff]
        %104 = vst [vmem:[%s38 + $0x100] sm:$0xff] %v103
        %v105 = vld [vmem:[%s37 + $0x108] sm:$0xff]
        %106 = vst [vmem:[%s38 + $0x108] sm:$0xff] %v105
        %v107 = vld [vmem:[%s37 + $0x110] sm:$0xff]
        %108 = vst [vmem:[%s38 + $0x110] sm:$0xff] %v107
        %v109 = vld [vmem:[%s37 + $0x118] sm:$0xff]
        %110 = vst [vmem:[%s38 + $0x118] sm:$0xff] %v109
        %v111 = vld [vmem:[%s37 + $0x120] sm:$0xff]
        %112 = vst [vmem:[%s38 + $0x120] sm:$0xff] %v111
        %v113 = vld [vmem:[%s37 + $0x128] sm:$0xff]
        %114 = vst [vmem:[%s38 + $0x128] sm:$0xff] %v113
        %v115 = vld [vmem:[%s37 + $0x130] sm:$0xff]
        %116 = vst [vmem:[%s38 + $0x130] sm:$0xff] %v115
        %v117 = vld [vmem:[%s37 + $0x138] sm:$0xff]
        %118 = vst [vmem:[%s38 + $0x138] sm:$0xff] %v117
        %v119 = vld [vmem:[%s37 + $0x140] sm:$0xff]
        %120 = vst [vmem:[%s38 + $0x140] sm:$0xff] %v119
        %v121 = vld [vmem:[%s37 + $0x148] sm:$0xff]
        %122 = vst [vmem:[%s38 + $0x148] sm:$0xff] %v121
      $region25: #{tpu_custom_call.1} parent=19 // loop_footer
        %s36 = sadd.s32 1, %s32
      $region26: #{tpu_custom_call.1} parent=19 // loop_footer_branch
        %31 = sbr.rel target = $region22
      $region27: #{tpu_custom_call.1} parent=19 // loop_exit
        _
    $region20: #{tpu_custom_call.1} parent=4 // pred_fallthru
      _
    %p123 = pneg %p27
    // Predicated region
    $region28: #{tpu_custom_call.1} parent=4 // pred_check
      _
    $region29: #{tpu_custom_call.1} parent=4 // pred_check_branch
      %125 = sbr.rel (%p27) target = $region31
    $region30: #{tpu_custom_call.1} parent=4 // pred_region
      %s126 = sand.u32 336, 7
    $region31: #{tpu_custom_call.1} parent=4 // pred_fallthru
      _
  $region5: #{tpu_custom_call.1} parent=0 // pred_fallthru
    _
  // Predicated region
  $region6: #{tpu_custom_call.1} parent=0 // pred_check
    %p11 = pneg %p7
  $region7: #{tpu_custom_call.1} parent=0 // pred_check_branch
    %13 = sbr.rel (%p11) target = $region9
  $region8: #{tpu_custom_call.1} parent=0 // pred_region
    %s14 = sshll.u32 1, 336
    %s15 = ssub.s32 %s14, 1
    loop: start=0, step=1, limit=1
    $region10: #{tpu_custom_call.1} parent=8 // loop_pre_header
      _
    $region11: #{tpu_custom_call.1} parent=8 // loop_header
      %s17 = sphi 0, %s21
      %p18 = scmp.ge.s32.totalorder %s17, 1
      %s22 = sphi %s0, %s0
      %s23 = sphi %s1, %s1
    $region12: #{tpu_custom_call.1} parent=8 // loop_header_branch
      %20 = sbr.rel (%p18) target = $region16
    $region13: #{tpu_custom_call.1} parent=8 // loop_body
      %v24 = vld [vmem:[%s22] sm:%s15]
      %25 = vst [vmem:[%s23] sm:%s15] %v24
    $region14: #{tpu_custom_call.1} parent=8 // loop_footer
      %s21 = sadd.s32 1, %s17
    $region15: #{tpu_custom_call.1} parent=8 // loop_footer_branch
      %16 = sbr.rel target = $region11
    $region16: #{tpu_custom_call.1} parent=8 // loop_exit
      _
  $region9: #{tpu_custom_call.1} parent=0 // pred_fallthru
    _
  // Predicated region
  $region32: #{tpu_custom_call.1} parent=0 // pred_check
    _
  $region33: #{tpu_custom_call.1} parent=0 // pred_check_branch
    %129 = sbr.rel (0) target = $region35
  $region34: #{tpu_custom_call.1} parent=0 // pred_region
    %130 = vsyncadd [#allocation2], 5376
  $region35: #{tpu_custom_call.1} parent=0 // pred_fallthru
    _
  %s131 = smul.u32 2, 168
  %s132 = smul.u32 %s131, 1
  %s133 = sshll.u32 %s132, 4
  %134 = dma.done [#allocation2], %s133
  %135 = vsyncmov [#allocation2]
  %s136 = vpop.sfrf %135
  %p137 = scmp.eq.s32.totalorder %s136, 0
  %p138 = pneg %p137
  %140 = shalt.err (%p138)

</llo_original>
